<compile_context>
chip_gen: v7x
topology: tpu7x:2x2x1
jax: 0.10.0
libtpu: 0.0.40
codegen_flags: <defaults>
</compile_context>

<pallas_src>
import math
from functools import partial

import jax
import jax.numpy as jnp
import numpy as np
from jax.experimental import pallas as pl
from jax.experimental.pallas import tpu as pltpu


def _gat_kernel(hs_ref, ht_ref, ha_ref, v_ref, o_ref, *, negative_slope: float):
    h_in = hs_ref.shape[-1]
    a_in = ha_ref.shape[-1]

    v = v_ref[...]                                   # (1, 2*h_in + a_in), f32
    v_s = v[:, 0 * h_in:1 * h_in]                    # (1, h_in)
    v_t = v[:, 1 * h_in:2 * h_in]                    # (1, h_in)
    v_a = v[:, 2 * h_in:2 * h_in + a_in]             # (1, a_in)

    hs = hs_ref[...].astype(jnp.float32)             # (tn, h_in)
    ht = ht_ref[...].astype(jnp.float32)             # (tn, h_in)
    ha = ha_ref[...].astype(jnp.float32)             # (tn, a_in)

    # VPU multiply + lane reduce (mathematically == (h @ W) . a_chunk).
    logits = (
        jnp.sum(hs * v_s, axis=-1, keepdims=True)
        + jnp.sum(ht * v_t, axis=-1, keepdims=True)
        + jnp.sum(ha * v_a, axis=-1, keepdims=True)
    )                                                # (tn, 1) f32

    o_ref[...] = jnp.where(logits >= 0, logits, negative_slope * logits)


def gat_layer(h_src, h_tgt, h_arc, w_src, w_tgt, w_arc, w_att,
              *, negative_slope: float = 0.01, block_rows: int = 4096,
              min_grid_steps: int = 4):
    """Fused GATLayer.forward.

    h_src, h_tgt : (N, h_in_dim)           (any float dtype; streamed natively)
    h_arc        : (N, arc_in_dim) or (N, 1, arc_in_dim)
    w_src, w_tgt : (out_dim, h_in_dim)     -- PyTorch nn.Linear weight layout
    w_arc        : (out_dim, arc_in_dim)
    w_att        : (1, 3*out_dim)
    returns      : (N, 1) = leaky_relu(attn_fc([src | tgt | arc]))
    """
    h_arc = jnp.asarray(h_arc).astype(jnp.float32)   # PyTorch: h_arc.float()
    if h_arc.ndim == 3:
        if h_arc.shape[1] != 1:
            # PyTorch squeeze(1) would silently no-op and the cat would fail;
            # only the middle-dim==1 case is a valid forward.
            raise ValueError("3-D h_arc must have middle dim == 1")
        h_arc = h_arc[:, 0, :]
    h_src = jnp.asarray(h_src)                       # native dtype (bf16 ok)
    h_tgt = jnp.asarray(h_tgt)

    N, h_in = h_src.shape
    a_in = h_arc.shape[-1]
    d_out = w_src.shape[0]
    P = 2 * h_in + a_in

    # Fold the attention vector into the projection weights (wrapper-side,
    # negligible cost: a few (1, Dout) x (Dout, K) matvecs).
    w_src = jnp.asarray(w_src, jnp.float32)          # (d_out, h_in)
    w_tgt = jnp.asarray(w_tgt, jnp.float32)
    w_arc = jnp.asarray(w_arc, jnp.float32)          # (d_out, a_in)
    w_att = jnp.asarray(w_att, jnp.float32)          # (1, 3*d_out)
    a_s = w_att[:, 0 * d_out:1 * d_out]
    a_t = w_att[:, 1 * d_out:2 * d_out]
    a_a = w_att[:, 2 * d_out:3 * d_out]
    v_all = jnp.concatenate([a_s @ w_src, a_t @ w_tgt, a_a @ w_arc], axis=1)  # (1, P)

    # Row tile: as large as block_rows, but keep >= min_grid_steps grid steps
    # when N allows (feeds both TensorCores on v7x via the parallel axis).
    tn = max(8, min(block_rows, ((pl.cdiv(N, min_grid_steps) + 7) // 8) * 8))
    grid = (pl.cdiv(N, tn),)                         # no wrapper-side padding

    in_bytes = (int(h_src.dtype.itemsize) * h_in
                + int(h_tgt.dtype.itemsize) * h_in
                + 4 * a_in)
    flops = 2 * N * P + 4 * N
    bytes_accessed = N * (in_bytes + 4) + 4 * P

    kernel = partial(_gat_kernel, negative_slope=float(negative_slope))

    out = pl.pallas_call(
        kernel,
        out_shape=jax.ShapeDtypeStruct((N, 1), jnp.float32),
        grid_spec=pltpu.PrefetchScalarGridSpec(
            num_scalar_prefetch=0,
            grid=grid,
            in_specs=[
                pl.BlockSpec((tn, h_in), lambda i: (i, 0)),   # h_src row tile
                pl.BlockSpec((tn, h_in), lambda i: (i, 0)),   # h_tgt row tile
                pl.BlockSpec((tn, a_in), lambda i: (i, 0)),   # h_arc row tile
                pl.BlockSpec((1, P), lambda i: (0, 0)),       # folded vectors (resident)
            ],
            out_specs=pl.BlockSpec((tn, 1), lambda i: (i, 0)),
        ),
        compiler_params=pltpu.CompilerParams(
            dimension_semantics=("parallel",)),
        cost_estimate=pl.CostEstimate(
            flops=flops, transcendentals=0, bytes_accessed=bytes_accessed),
    )(h_src, h_tgt, h_arc, v_all)

    return out


if __name__ == "__main__":
    # Small shapes consistent with the module; N not a multiple of the tile
    # size, so the un-padded partial-last-block path is exercised.
    E, H_IN, ARC_IN, D_OUT = 200, 32, 16, 32

    key = jax.random.PRNGKey(0)
    k1, k2, k3, k4, k5, k6, k7 = jax.random.split(key, 7)

    h_src = jax.random.normal(k1, (E, H_IN), dtype=jnp.float32)
    h_tgt = jax.random.normal(k2, (E, H_IN), dtype=jnp.float32)
    h_arc = jax.random.normal(k3, (E, 1, ARC_IN), dtype=jnp.float32)  # exercises squeeze(1)

    # Xavier-normal-ish init with relu gain, mirroring reset_parameters().
    gain = math.sqrt(2.0)
    w_src = gain * math.sqrt(2.0 / (H_IN + D_OUT)) * jax.random.normal(k4, (D_OUT, H_IN), jnp.float32)
    w_tgt = gain * math.sqrt(2.0 / (H_IN + D_OUT)) * jax.random.normal(k5, (D_OUT, H_IN), jnp.float32)
    w_arc = gain * math.sqrt(2.0 / (ARC_IN + D_OUT)) * jax.random.normal(k6, (D_OUT, ARC_IN), jnp.float32)
    w_att = gain * math.sqrt(2.0 / (3 * D_OUT + 1)) * jax.random.normal(k7, (1, 3 * D_OUT), jnp.float32)

    out = gat_layer(h_src, h_tgt, h_arc, w_src, w_tgt, w_arc, w_att)
    out = jax.block_until_ready(out)

    # Plain-JAX reference replicating the PyTorch forward exactly (unfolded).
    src = h_src @ w_src.T
    tgt = h_tgt @ w_tgt.T
    arc = (h_arc.astype(jnp.float32) @ w_arc.T).reshape(E, D_OUT)   # squeeze(1)
    cat = jnp.concatenate([src, tgt, arc], axis=1)
    a = cat @ w_att.T
    ref = jnp.where(a >= 0, a, 0.01 * a)

    # Folding W_att into the projections reorders the f32 summation slightly.
    np.testing.assert_allclose(np.asarray(out), np.asarray(ref), rtol=1e-4, atol=1e-5)
    assert out.shape == (E, 1)
    print("KERNEL_OK")
</pallas_src>

<mosaic_0001>
module attributes {stable_mosaic.version = 11 : i64} {
  func.func @_gat_kernel(%arg0: i32, %arg1: memref<56x32xf32, #tpu.memory_space<vmem>>, %arg2: memref<56x32xf32, #tpu.memory_space<vmem>>, %arg3: memref<56x16xf32, #tpu.memory_space<vmem>>, %arg4: memref<1x80xf32, #tpu.memory_space<vmem>>, %arg5: memref<56x1xf32, #tpu.memory_space<vmem>>) attributes {dimension_semantics = [#tpu.dimension_semantics<parallel>], iteration_bounds = array<i64: 4>, scalar_prefetch = 0 : i64, scratch_operands = 0 : i64, tpu.core_type = #tpu.core_type<tc>, window_params = [{transform_indices = @transform_0, window_bounds = array<i64: 56, 32>}, {transform_indices = @transform_1, window_bounds = array<i64: 56, 32>}, {transform_indices = @transform_2, window_bounds = array<i64: 56, 16>}, {pipeline_mode = #tpu.pipeline_mode<synchronous>, transform_indices = @transform_3, window_bounds = array<i64: 1, 80>}, {transform_indices = @transform_4, window_bounds = array<i64: 56, 1>}]} {
    %c0 = arith.constant 0 : index
    %c0_0 = arith.constant 0 : index
    %0 = vector.load %arg4[%c0, %c0_0] : memref<1x80xf32, #tpu.memory_space<vmem>>, vector<1x80xf32>
    %1 = vector.extract_strided_slice %0 {offsets = [0, 0], sizes = [1, 32], strides = [1, 1]} : vector<1x80xf32> to vector<1x32xf32>
    %2 = vector.extract_strided_slice %0 {offsets = [0, 32], sizes = [1, 32], strides = [1, 1]} : vector<1x80xf32> to vector<1x32xf32>
    %3 = vector.extract_strided_slice %0 {offsets = [0, 64], sizes = [1, 16], strides = [1, 1]} : vector<1x80xf32> to vector<1x16xf32>
    %c0_1 = arith.constant 0 : index
    %c0_2 = arith.constant 0 : index
    %4 = vector.load %arg1[%c0_1, %c0_2] : memref<56x32xf32, #tpu.memory_space<vmem>>, vector<56x32xf32>
    %c0_3 = arith.constant 0 : index
    %c0_4 = arith.constant 0 : index
    %5 = vector.load %arg2[%c0_3, %c0_4] : memref<56x32xf32, #tpu.memory_space<vmem>>, vector<56x32xf32>
    %c0_5 = arith.constant 0 : index
    %c0_6 = arith.constant 0 : index
    %6 = vector.load %arg3[%c0_5, %c0_6] : memref<56x16xf32, #tpu.memory_space<vmem>>, vector<56x16xf32>
    %7 = vector.broadcast %1 : vector<1x32xf32> to vector<56x32xf32>
    %8 = arith.mulf %4, %7 : vector<56x32xf32>
    %cst = arith.constant dense<0.000000e+00> : vector<56xf32>
    %9 = vector.multi_reduction <add>, %8, %cst [1] : vector<56x32xf32> to vector<56xf32>
    %10 = vector.shape_cast %9 : vector<56xf32> to vector<56x1xf32>
    %11 = vector.broadcast %2 : vector<1x32xf32> to vector<56x32xf32>
    %12 = arith.mulf %5, %11 : vector<56x32xf32>
    %cst_7 = arith.constant dense<0.000000e+00> : vector<56xf32>
    %13 = vector.multi_reduction <add>, %12, %cst_7 [1] : vector<56x32xf32> to vector<56xf32>
    %14 = vector.shape_cast %13 : vector<56xf32> to vector<56x1xf32>
    %15 = arith.addf %10, %14 : vector<56x1xf32>
    %16 = vector.broadcast %3 : vector<1x16xf32> to vector<56x16xf32>
    %17 = arith.mulf %6, %16 : vector<56x16xf32>
    %cst_8 = arith.constant dense<0.000000e+00> : vector<56xf32>
    %18 = vector.multi_reduction <add>, %17, %cst_8 [1] : vector<56x16xf32> to vector<56xf32>
    %19 = vector.shape_cast %18 : vector<56xf32> to vector<56x1xf32>
    %20 = arith.addf %15, %19 : vector<56x1xf32>
    %cst_9 = arith.constant 0.000000e+00 : f32
    %21 = vector.broadcast %cst_9 : f32 to vector<56x1xf32>
    %22 = arith.cmpf oge, %20, %21 : vector<56x1xf32>
    %cst_10 = arith.constant 0.00999999977 : f32
    %23 = vector.broadcast %cst_10 : f32 to vector<56x1xf32>
    %24 = arith.mulf %23, %20 : vector<56x1xf32>
    %25 = arith.select %22, %20, %24 : vector<56x1xi1>, vector<56x1xf32>
    %c0_11 = arith.constant 0 : index
    %c0_12 = arith.constant 0 : index
    %26 = vector.load %arg5[%c0_11, %c0_12] : memref<56x1xf32, #tpu.memory_space<vmem>>, vector<56x1xf32>
    tpu.vector_store %arg5[%c0_11, %c0_12], %25 {strides = array<i32>} : memref<56x1xf32, #tpu.memory_space<vmem>>, vector<56x1xf32>,
    return
  }
  func.func @transform_0(%arg0: i32) -> (i32, i32) {
    %c0_i32 = arith.constant 0 : i32
    %c0_i32_0 = arith.constant 0 : i32
    return %arg0, %c0_i32 : i32, i32
  }
  func.func @transform_1(%arg0: i32) -> (i32, i32) {
    %c0_i32 = arith.constant 0 : i32
    %c0_i32_0 = arith.constant 0 : i32
    return %arg0, %c0_i32 : i32, i32
  }
  func.func @transform_2(%arg0: i32) -> (i32, i32) {
    %c0_i32 = arith.constant 0 : i32
    %c0_i32_0 = arith.constant 0 : i32
    return %arg0, %c0_i32 : i32, i32
  }
  func.func @transform_3(%arg0: i32) -> (i32, i32) {
    %c0_i32 = arith.constant 0 : i32
    %c0_i32_0 = arith.constant 0 : i32
    %c0_i32_1 = arith.constant 0 : i32
    return %c0_i32, %c0_i32_0 : i32, i32
  }
  func.func @transform_4(%arg0: i32) -> (i32, i32) {
    %c0_i32 = arith.constant 0 : i32
    %c0_i32_0 = arith.constant 0 : i32
    return %arg0, %c0_i32 : i32, i32
  }
}

</mosaic_0001>

<llo_original>
// kernel: tpu_custom_call.1
$region0: #{tpu_custom_call.1}
  #allocation0 [shape = 'u32[]', space=smem, size = 0x4, offset = 0x4, fixed_abs, tag = 'smem constant byte address 0x4 - core index']
  #allocation1 [shape = 'u32[144,128]{1,0:T(1,128)}', space=vmem, size = 0x12000, scoped, tag = 'internal scratch']
  %s0 = inlined_call_operand.vmem [shape: f32[200,32], index: 0, kind: input, shape index: {}]
  %s1 = inlined_call_operand.vmem [shape: f32[200,32], index: 1, kind: input, shape index: {}]
  %s2 = inlined_call_operand.vmem [shape: f32[200,16], index: 2, kind: input, shape index: {}]
  %s3 = inlined_call_operand.vmem [shape: f32[1,80], index: 3, kind: input, shape index: {}]
  %s4 = inlined_call_operand.vmem [shape: f32[200,1], index: 4, kind: output, shape index: {}]
  %s5 = sld [smem:[#allocation0]]
  $region97: #{tpu_custom_call.1} parent=0
    _
  %s7 = ssub.s32 1, %s5
  %s8 = scalar_select 0, %s7, %s5
  $region1: #{tpu_custom_call.1} parent=0
    #allocation2 [shape = 'u8[57344]{0}', space=vmem, size = 0xe000, scoped, tag = 'output window, operand 0']
    loop: start=0, step=1, limit=6
    $region2: #{tpu_custom_call.1} parent=1 // loop_pre_header
      _
    $region3: #{tpu_custom_call.1} parent=1 // loop_header
      %s10 = sphi 0, %s14
      %p11 = scmp.ge.s32.totalorder %s10, 6
      %s20 = sphi 0, %s22
      %s23 = sphi 0, %s20
      %s24 = sphi 0, %s23
      %s40 = sphi 0, %s24
      %s46 = sphi 0, %s48
      %s49 = sphi 0, %s46
      %s50 = sphi 0, %s49
      %s66 = sphi 0, %s50
      %s72 = sphi 0, %s74
      %s75 = sphi 0, %s72
      %s76 = sphi 0, %s75
      %s92 = sphi 0, %s76
      %s96 = sphi 0, %s96
      %s98 = sphi 0, %s96
      %s99 = sphi 0, %s98
      %s113 = sphi 0, %s99
      %s119 = sphi 0, %s121
      %s122 = sphi 0, %s119
      %s123 = sphi 0, %s122
      %s139 = sphi 0, %s123
    $region4: #{tpu_custom_call.1} parent=1 // loop_header_branch
      %13 = sbr.rel (%p11) target = $region8
    $region5: #{tpu_custom_call.1} parent=1 // loop_body
      %s15 = ssub.s32 %s10, 1
      %s16 = ssub.s32 %s10, 2
      %s17 = sadd.s32 %s10, 1
      %s18 = ssub.s32 %s10, %s17
      %p19 = scmp.eq.s32.totalorder %s18, 0
      %s21 = sadd.s32 %s20, 1
      %s22 = scalar_select %p19, %s20, %s21
      %p25 = pneg %p19
      %p26 = scmp.eq.s32.totalorder %s10, 3
      %p27 = por %p25, %p26
      %p28 = scmp.ne.s32.totalorder %s20, %s23
      %p29 = scmp.eq.s32.totalorder %s10, 0
      %p30 = por %p28, %p29
      %p31 = scmp.ne.s32.totalorder %s20, %s23
      %p32 = scmp.eq.s32.totalorder %s15, 3
      %p33 = por %p31, %p32
      %p34 = scmp.ne.s32.totalorder %s23, %s24
      %p35 = scmp.eq.s32.totalorder %s15, 0
      %p36 = por %p34, %p35
      %p37 = scmp.ne.s32.totalorder %s23, %s24
      %p38 = scmp.eq.s32.totalorder %s16, 3
      %p39 = por %p37, %p38
      %p41 = scmp.ne.s32.totalorder %s24, %s40
      %p42 = scmp.eq.s32.totalorder %s16, 0
      %p43 = por %p41, %p42
      %s44 = ssub.s32 %s10, %s17
      %p45 = scmp.eq.s32.totalorder %s44, 0
      %s47 = sadd.s32 %s46, 1
      %s48 = scalar_select %p45, %s46, %s47
      %p51 = pneg %p45
      %p52 = scmp.eq.s32.totalorder %s10, 3
      %p53 = por %p51, %p52
      %p54 = scmp.ne.s32.totalorder %s46, %s49
      %p55 = scmp.eq.s32.totalorder %s10, 0
      %p56 = por %p54, %p55
      %p57 = scmp.ne.s32.totalorder %s46, %s49
      %p58 = scmp.eq.s32.totalorder %s15, 3
      %p59 = por %p57, %p58
      %p60 = scmp.ne.s32.totalorder %s49, %s50
      %p61 = scmp.eq.s32.totalorder %s15, 0
      %p62 = por %p60, %p61
      %p63 = scmp.ne.s32.totalorder %s49, %s50
      %p64 = scmp.eq.s32.totalorder %s16, 3
      %p65 = por %p63, %p64
      %p67 = scmp.ne.s32.totalorder %s50, %s66
      %p68 = scmp.eq.s32.totalorder %s16, 0
      %p69 = por %p67, %p68
      %s70 = ssub.s32 %s10, %s17
      %p71 = scmp.eq.s32.totalorder %s70, 0
      %s73 = sadd.s32 %s72, 1
      %s74 = scalar_select %p71, %s72, %s73
      %p77 = pneg %p71
      %p78 = scmp.eq.s32.totalorder %s10, 3
      %p79 = por %p77, %p78
      %p80 = scmp.ne.s32.totalorder %s72, %s75
      %p81 = scmp.eq.s32.totalorder %s10, 0
      %p82 = por %p80, %p81
      %p83 = scmp.ne.s32.totalorder %s72, %s75
      %p84 = scmp.eq.s32.totalorder %s15, 3
      %p85 = por %p83, %p84
      %p86 = scmp.ne.s32.totalorder %s75, %s76
      %p87 = scmp.eq.s32.totalorder %s15, 0
      %p88 = por %p86, %p87
      %p89 = scmp.ne.s32.totalorder %s75, %s76
      %p90 = scmp.eq.s32.totalorder %s16, 3
      %p91 = por %p89, %p90
      %p93 = scmp.ne.s32.totalorder %s76, %s92
      %p94 = scmp.eq.s32.totalorder %s16, 0
      %p95 = por %p93, %p94
      %s97 = sadd.s32 %s96, 1
      %p100 = scmp.eq.s32.totalorder %s10, 3
      %p101 = scmp.ne.s32.totalorder %s96, %s98
      %p102 = scmp.eq.s32.totalorder %s10, 0
      %p103 = por %p101, %p102
      %p104 = scmp.ne.s32.totalorder %s96, %s98
      %p105 = scmp.eq.s32.totalorder %s15, 3
      %p106 = por %p104, %p105
      %p107 = scmp.ne.s32.totalorder %s98, %s99
      %p108 = scmp.eq.s32.totalorder %s15, 0
      %p109 = por %p107, %p108
      %p110 = scmp.ne.s32.totalorder %s98, %s99
      %p111 = scmp.eq.s32.totalorder %s16, 3
      %p112 = por %p110, %p111
      %p114 = scmp.ne.s32.totalorder %s99, %s113
      %p115 = scmp.eq.s32.totalorder %s16, 0
      %p116 = por %p114, %p115
      %s117 = ssub.s32 %s10, %s17
      %p118 = scmp.eq.s32.totalorder %s117, 0
      %s120 = sadd.s32 %s119, 1
      %s121 = scalar_select %p118, %s119, %s120
      %p124 = pneg %p118
      %p125 = scmp.eq.s32.totalorder %s10, 3
      %p126 = por %p124, %p125
      %p127 = scmp.ne.s32.totalorder %s119, %s122
      %p128 = scmp.eq.s32.totalorder %s10, 0
      %p129 = por %p127, %p128
      %p130 = scmp.ne.s32.totalorder %s119, %s122
      %p131 = scmp.eq.s32.totalorder %s15, 3
      %p132 = por %p130, %p131
      %p133 = scmp.ne.s32.totalorder %s122, %s123
      %p134 = scmp.eq.s32.totalorder %s15, 0
      %p135 = por %p133, %p134
      %p136 = scmp.ne.s32.totalorder %s122, %s123
      %p137 = scmp.eq.s32.totalorder %s16, 3
      %p138 = por %p136, %p137
      %p140 = scmp.ne.s32.totalorder %s123, %s139
      %p141 = scmp.eq.s32.totalorder %s16, 0
      %p142 = por %p140, %p141
      %p143 = scmp.le.s32.totalorder 1, %s10
      %p144 = scmp.lt.s32.totalorder %s10, 5
      %p145 = pnand %p143, %p144
      %p146 = pneg %p145
      // Predicated region
      $region9: #{tpu_custom_call.1} parent=5 // pred_check
        _
      $region10: #{tpu_custom_call.1} parent=5 // pred_check_branch
        %148 = sbr.rel (%p145) target = $region12
      $region11: #{tpu_custom_call.1} parent=5 // pred_region
        %s149 = ssub.s32 %s10, 1
        // Predicated region
        $region13: #{tpu_custom_call.1} parent=11 // pred_check
          %p150 = pneg %p109
        $region14: #{tpu_custom_call.1} parent=11 // pred_check_branch
          %152 = sbr.rel (%p150) target = $region16
        $region15: #{tpu_custom_call.1} parent=11 // pred_region
          _
        $region16: #{tpu_custom_call.1} parent=11 // pred_fallthru
          _
      $region12: #{tpu_custom_call.1} parent=5 // pred_fallthru
        _
      %p153 = scmp.lt.s32.totalorder %s10, 4
      // Predicated region
      $region17: #{tpu_custom_call.1} parent=5 // pred_check
        %p154 = pneg %p153
      $region18: #{tpu_custom_call.1} parent=5 // pred_check_branch
        %156 = sbr.rel (%p154) target = $region20
      $region19: #{tpu_custom_call.1} parent=5 // pred_region
        // Predicated region
        $region21: #{tpu_custom_call.1} parent=19 // pred_check
          %p157 = pneg %p30
        $region22: #{tpu_custom_call.1} parent=19 // pred_check_branch
          %159 = sbr.rel (%p157) target = $region24
        $region23: #{tpu_custom_call.1} parent=19 // pred_region
          %s160 = smul.u32 7, %s10
          %s161 = ssub.s32 25, %s160
          %p162 = scmp.lt.s32.totalorder %s161, 7
          %s163 = scalar_select %p162, %s161, 7
          %s164 = smul.u32 128, %s163
          %p165 = scmp.lt.s32.totalorder %s160, 24
          %s166 = scalar_select %p165, %s160, 24
          %s167 = smul.addr %s166, 8
          %s168 = scalar_lea.vmem %s0, %s167
          %s169 = smul.u32 7, %s10
          %s170 = ssub.s32 25, %s169
          %p171 = scmp.lt.s32.totalorder %s170, 7
          %s172 = scalar_select %p171, %s170, 7
          %s173 = smul.u32 128, %s172
        $region24: #{tpu_custom_call.1} parent=19 // pred_fallthru
          _
        // Predicated region
        $region25: #{tpu_custom_call.1} parent=19 // pred_check
          %p174 = pneg %p56
        $region26: #{tpu_custom_call.1} parent=19 // pred_check_branch
          %176 = sbr.rel (%p174) target = $region28
        $region27: #{tpu_custom_call.1} parent=19 // pred_region
          %s177 = smul.u32 7, %s10
          %s178 = ssub.s32 25, %s177
          %p179 = scmp.lt.s32.totalorder %s178, 7
          %s180 = scalar_select %p179, %s178, 7
          %s181 = smul.u32 128, %s180
          %p182 = scmp.lt.s32.totalorder %s177, 24
          %s183 = scalar_select %p182, %s177, 24
          %s184 = smul.addr %s183, 8
          %s185 = scalar_lea.vmem %s1, %s184
          %s186 = smul.u32 7, %s10
          %s187 = ssub.s32 25, %s186
          %p188 = scmp.lt.s32.totalorder %s187, 7
          %s189 = scalar_select %p188, %s187, 7
          %s190 = smul.u32 128, %s189
        $region28: #{tpu_custom_call.1} parent=19 // pred_fallthru
          _
        // Predicated region
        $region29: #{tpu_custom_call.1} parent=19 // pred_check
          %p191 = pneg %p82
        $region30: #{tpu_custom_call.1} parent=19 // pred_check_branch
          %193 = sbr.rel (%p191) target = $region32
        $region31: #{tpu_custom_call.1} parent=19 // pred_region
          %s194 = smul.u32 7, %s10
          %s195 = ssub.s32 25, %s194
          %p196 = scmp.lt.s32.totalorder %s195, 7
          %s197 = scalar_select %p196, %s195, 7
          %s198 = smul.u32 128, %s197
          %p199 = scmp.lt.s32.totalorder %s194, 24
          %s200 = scalar_select %p199, %s194, 24
          %s201 = smul.addr %s200, 8
          %s202 = scalar_lea.vmem %s2, %s201
          %s203 = smul.u32 7, %s10
          %s204 = ssub.s32 25, %s203
          %p205 = scmp.lt.s32.totalorder %s204, 7
          %s206 = scalar_select %p205, %s204, 7
          %s207 = smul.u32 128, %s206
        $region32: #{tpu_custom_call.1} parent=19 // pred_fallthru
          _
      $region20: #{tpu_custom_call.1} parent=5 // pred_fallthru
        _
      %p208 = scmp.le.s32.totalorder 1, %s10
      %p209 = scmp.lt.s32.totalorder %s10, 5
      %p210 = pnand %p208, %p209
      %p211 = pneg %p210
      // Predicated region
      $region33: #{tpu_custom_call.1} parent=5 // pred_check
        _
      $region34: #{tpu_custom_call.1} parent=5 // pred_check_branch
        %213 = sbr.rel (%p210) target = $region36
      $region35: #{tpu_custom_call.1} parent=5 // pred_region
        %s214 = ssub.s32 %s10, 1
        %s215 = smul.u32 7, %s15
        %s216 = ssub.s32 25, %s215
        %p217 = scmp.lt.s32.totalorder %s216, 7
        %s218 = scalar_select %p217, %s216, 7
        %s219 = smul.u32 128, %s218
        %p220 = scmp.lt.s32.totalorder %s215, 24
        %s221 = scalar_select %p220, %s215, 24
        %s222 = smul.addr %s221, 8
        %s223 = scalar_lea.vmem %s0, %s222
        %p224 = pneg %p36
        %p225 = pneg %p33
        %s226 = smul.u32 7, %s15
        %s227 = ssub.s32 25, %s226
        %p228 = scmp.lt.s32.totalorder %s227, 7
        %s229 = scalar_select %p228, %s227, 7
        %s230 = smul.u32 128, %s229
        %p231 = scmp.lt.s32.totalorder %s226, 24
        %s232 = scalar_select %p231, %s226, 24
        %s233 = smul.addr %s232, 8
        %s234 = scalar_lea.vmem %s1, %s233
        %p235 = pneg %p62
        %p236 = pneg %p59
        %s237 = smul.u32 7, %s15
        %s238 = ssub.s32 25, %s237
        %p239 = scmp.lt.s32.totalorder %s238, 7
        %s240 = scalar_select %p239, %s238, 7
        %s241 = smul.u32 128, %s240
        %p242 = scmp.lt.s32.totalorder %s237, 24
        %s243 = scalar_select %p242, %s237, 24
        %s244 = smul.addr %s243, 8
        %s245 = scalar_lea.vmem %s2, %s244
        %p246 = pneg %p88
        %p247 = pneg %p85
        %p248 = pneg %p109
        %p249 = pneg %p106
        %p250 = pneg %p135
        %p251 = pneg %p132
        %s252 = sand.u32 %s122, 1
        %s253 = sand.u32 %s122, 1
        %s254 = smul.addr %s253, 56
        %s255 = scalar_lea.vmem [#allocation2], %s254
        %s256 = smul.u32 7, %s15
        %s257 = ssub.s32 25, %s256
        %p258 = scmp.lt.s32.totalorder %s257, 7
        %s259 = scalar_select %p258, %s257, 7
        %s260 = smul.u32 128, %s259
        %p261 = scmp.lt.s32.totalorder %s256, 24
        %s262 = scalar_select %p261, %s256, 24
        %s263 = smul.addr %s262, 8
        %s264 = scalar_lea.vmem %s0, %s263
        %s265 = smul.u32 7, %s15
        %s266 = ssub.s32 25, %s265
        %p267 = scmp.lt.s32.totalorder %s266, 7
        %s268 = scalar_select %p267, %s266, 7
        %s269 = smul.u32 128, %s268
        %s270 = smul.u32 7, %s15
        %s271 = ssub.s32 25, %s270
        %p272 = scmp.lt.s32.totalorder %s271, 7
        %s273 = scalar_select %p272, %s271, 7
        %s274 = smul.u32 128, %s273
        %p275 = scmp.lt.s32.totalorder %s270, 24
        %s276 = scalar_select %p275, %s270, 24
        %s277 = smul.addr %s276, 8
        %s278 = scalar_lea.vmem %s1, %s277
        %s279 = smul.u32 7, %s15
        %s280 = ssub.s32 25, %s279
        %p281 = scmp.lt.s32.totalorder %s280, 7
        %s282 = scalar_select %p281, %s280, 7
        %s283 = smul.u32 128, %s282
        %s284 = smul.u32 7, %s15
        %s285 = ssub.s32 25, %s284
        %p286 = scmp.lt.s32.totalorder %s285, 7
        %s287 = scalar_select %p286, %s285, 7
        %s288 = smul.u32 128, %s287
        %p289 = scmp.lt.s32.totalorder %s284, 24
        %s290 = scalar_select %p289, %s284, 24
        %s291 = smul.addr %s290, 8
        %s292 = scalar_lea.vmem %s2, %s291
        %s293 = smul.u32 7, %s15
        %s294 = ssub.s32 25, %s293
        %p295 = scmp.lt.s32.totalorder %s294, 7
        %s296 = scalar_select %p295, %s294, 7
        %s297 = smul.u32 128, %s296
        %s298 = smul.u32 7, %s15
        %s299 = ssub.s32 25, %s298
        %p300 = scmp.lt.s32.totalorder %s299, 7
        %s301 = scalar_select %p300, %s299, 7
        %s302 = smul.u32 128, %s301
        %v303 = vld [vmem:[%s3] sm:$0x1]
        %v304 = vld [vmem:[%s264] sm:$0xff]
        %v305 = vld [vmem:[%s264 + $0x8] sm:$0xff]
        %v306 = vld [vmem:[%s264 + $0x10] sm:$0xff]
        %v307 = vld [vmem:[%s264 + $0x18] sm:$0xff]
        %v308 = vld [vmem:[%s264 + $0x20] sm:$0xff]
        %v309 = vld [vmem:[%s264 + $0x28] sm:$0xff]
        %v310 = vld [vmem:[%s264 + $0x30] sm:$0xff]
        %v311 = vld [vmem:[%s278] sm:$0xff]
        %v312 = vld [vmem:[%s278 + $0x8] sm:$0xff]
        %v313 = vld [vmem:[%s278 + $0x10] sm:$0xff]
        %v314 = vld [vmem:[%s278 + $0x18] sm:$0xff]
        %v315 = vld [vmem:[%s278 + $0x20] sm:$0xff]
        %v316 = vld [vmem:[%s278 + $0x28] sm:$0xff]
        %v317 = vld [vmem:[%s278 + $0x30] sm:$0xff]
        %v318 = vld [vmem:[%s292] sm:$0xff]
        %v319 = vld [vmem:[%s292 + $0x8] sm:$0xff]
        %v320 = vld [vmem:[%s292 + $0x10] sm:$0xff]
        %v321 = vld [vmem:[%s292 + $0x18] sm:$0xff]
        %v322 = vld [vmem:[%s292 + $0x20] sm:$0xff]
        %v323 = vld [vmem:[%s292 + $0x28] sm:$0xff]
        %v324 = vld [vmem:[%s292 + $0x30] sm:$0xff]
        %v326 = vlaneseq
        %v327 = vshrl.u32 %v326, 7
        %v328 = vsub.s32 0, %v327
        %v329 = vrot.slane %v303, %v328
        %v331 = vmul.f32 %v304, %v329
        %v332 = vmul.f32 %v305, %v329
        %v333 = vmul.f32 %v306, %v329
        %v334 = vmul.f32 %v307, %v329
        %v335 = vmul.f32 %v308, %v329
        %v336 = vmul.f32 %v309, %v329
        %v337 = vmul.f32 %v310, %v329
        %vm338 = vcmask 261120
        %v339 = vsel %vm338, %v331, 0.0
        %340 = vadd.xlane.f32.xlu0 %v339
        %v341 = vpop.xlane.xlu0 %340
        %v342 = vsel %vm338, %v332, 0.0
        %343 = vadd.xlane.f32.xlu0 %v342
        %v344 = vpop.xlane.xlu0 %343
        %v345 = vsel %vm338, %v333, 0.0
        %346 = vadd.xlane.f32.xlu0 %v345
        %v347 = vpop.xlane.xlu0 %346
        %v348 = vsel %vm338, %v334, 0.0
        %349 = vadd.xlane.f32.xlu0 %v348
        %v350 = vpop.xlane.xlu0 %349
        %v351 = vsel %vm338, %v335, 0.0
        %352 = vadd.xlane.f32.xlu0 %v351
        %v353 = vpop.xlane.xlu0 %352
        %v354 = vsel %vm338, %v336, 0.0
        %355 = vadd.xlane.f32.xlu0 %v354
        %v356 = vpop.xlane.xlu0 %355
        %v357 = vsel %vm338, %v337, 0.0
        %358 = vadd.xlane.f32.xlu0 %v357
        %v359 = vpop.xlane.xlu0 %358
        %360 = vrot.lane.b32.xlu0 %v329, 96
        %v361 = vpop.permute.xlu0 %360
        %v363 = vmul.f32 %v311, %v361
        %v364 = vmul.f32 %v312, %v361
        %v365 = vmul.f32 %v313, %v361
        %v366 = vmul.f32 %v314, %v361
        %v367 = vmul.f32 %v315, %v361
        %v368 = vmul.f32 %v316, %v361
        %v369 = vmul.f32 %v317, %v361
        %v370 = vsel %vm338, %v363, 0.0
        %371 = vadd.xlane.f32.xlu0 %v370
        %v372 = vpop.xlane.xlu0 %371
        %v373 = vsel %vm338, %v364, 0.0
        %374 = vadd.xlane.f32.xlu0 %v373
        %v375 = vpop.xlane.xlu0 %374
        %v376 = vsel %vm338, %v365, 0.0
        %377 = vadd.xlane.f32.xlu0 %v376
        %v378 = vpop.xlane.xlu0 %377
        %v379 = vsel %vm338, %v366, 0.0
        %380 = vadd.xlane.f32.xlu0 %v379
        %v381 = vpop.xlane.xlu0 %380
        %v382 = vsel %vm338, %v367, 0.0
        %383 = vadd.xlane.f32.xlu0 %v382
        %v384 = vpop.xlane.xlu0 %383
        %v385 = vsel %vm338, %v368, 0.0
        %386 = vadd.xlane.f32.xlu0 %v385
        %v387 = vpop.xlane.xlu0 %386
        %v388 = vsel %vm338, %v369, 0.0
        %389 = vadd.xlane.f32.xlu0 %v388
        %v390 = vpop.xlane.xlu0 %389
        %v391 = vadd.f32 %v341, %v372
        %v392 = vadd.f32 %v344, %v375
        %v393 = vadd.f32 %v347, %v378
        %v394 = vadd.f32 %v350, %v381
        %v395 = vadd.f32 %v353, %v384
        %v396 = vadd.f32 %v356, %v387
        %v397 = vadd.f32 %v359, %v390
        %398 = vrot.lane.b32.xlu0 %v329, 64
        %v399 = vpop.permute.xlu0 %398
        %v401 = vmul.f32 %v318, %v399
        %v402 = vmul.f32 %v319, %v399
        %v403 = vmul.f32 %v320, %v399
        %v404 = vmul.f32 %v321, %v399
        %v405 = vmul.f32 %v322, %v399
        %v406 = vmul.f32 %v323, %v399
        %v407 = vmul.f32 %v324, %v399
        %vm408 = vcmask 130048
        %v409 = vsel %vm408, %v401, 0.0
        %410 = vadd.xlane.f32.xlu0 %v409
        %v411 = vpop.xlane.xlu0 %410
        %v412 = vsel %vm408, %v402, 0.0
        %413 = vadd.xlane.f32.xlu0 %v412
        %v414 = vpop.xlane.xlu0 %413
        %v415 = vsel %vm408, %v403, 0.0
        %416 = vadd.xlane.f32.xlu0 %v415
        %v417 = vpop.xlane.xlu0 %416
        %v418 = vsel %vm408, %v404, 0.0
        %419 = vadd.xlane.f32.xlu0 %v418
        %v420 = vpop.xlane.xlu0 %419
        %v421 = vsel %vm408, %v405, 0.0
        %422 = vadd.xlane.f32.xlu0 %v421
        %v423 = vpop.xlane.xlu0 %422
        %v424 = vsel %vm408, %v406, 0.0
        %425 = vadd.xlane.f32.xlu0 %v424
        %v426 = vpop.xlane.xlu0 %425
        %v427 = vsel %vm408, %v407, 0.0
        %428 = vadd.xlane.f32.xlu0 %v427
        %v429 = vpop.xlane.xlu0 %428
        %v430 = vadd.f32 %v391, %v411
        %v431 = vadd.f32 %v392, %v414
        %v432 = vadd.f32 %v393, %v417
        %v433 = vadd.f32 %v394, %v420
        %v434 = vadd.f32 %v395, %v423
        %v435 = vadd.f32 %v396, %v426
        %v436 = vadd.f32 %v397, %v429
        %vm437 = vcmp.ge.f32.partialorder %v430, 0.0
        %vm438 = vcmp.ge.f32.partialorder %v431, 0.0
        %vm439 = vcmp.ge.f32.partialorder %v432, 0.0
        %vm440 = vcmp.ge.f32.partialorder %v433, 0.0
        %vm441 = vcmp.ge.f32.partialorder %v434, 0.0
        %vm442 = vcmp.ge.f32.partialorder %v435, 0.0
        %vm443 = vcmp.ge.f32.partialorder %v436, 0.0
        %v444 = vmul.f32 %v430, 0.01
        %v445 = vmul.f32 %v431, 0.01
        %v446 = vmul.f32 %v432, 0.01
        %v447 = vmul.f32 %v433, 0.01
        %v448 = vmul.f32 %v434, 0.01
        %v449 = vmul.f32 %v435, 0.01
        %v450 = vmul.f32 %v436, 0.01
        %v451 = vsel %vm437, %v430, %v444
        %v452 = vsel %vm438, %v431, %v445
        %v453 = vsel %vm439, %v432, %v446
        %v454 = vsel %vm440, %v433, %v447
        %v455 = vsel %vm441, %v434, %v448
        %v456 = vsel %vm442, %v435, %v449
        %v457 = vsel %vm443, %v436, %v450
        %vm458 = vcmask 7168
        %459 = vst.msk [vmem:[%s255] sm:$0xff] %vm458, %v451
        %460 = vst.msk [vmem:[%s255 + $0x8] sm:$0xff] %vm458, %v452
        %461 = vst.msk [vmem:[%s255 + $0x10] sm:$0xff] %vm458, %v453
        %462 = vst.msk [vmem:[%s255 + $0x18] sm:$0xff] %vm458, %v454
        %463 = vst.msk [vmem:[%s255 + $0x20] sm:$0xff] %vm458, %v455
        %464 = vst.msk [vmem:[%s255 + $0x28] sm:$0xff] %vm458, %v456
        %465 = vst.msk [vmem:[%s255 + $0x30] sm:$0xff] %vm458, %v457
        %s466 = sand.u32 %s122, 1
        %s467 = sand.u32 %s122, 1
        %s468 = smul.addr %s467, 56
        %s469 = scalar_lea.vmem [#allocation2], %s468
        // Predicated region
        $region37: #{tpu_custom_call.1} parent=35 // pred_check
          %p470 = pneg %p132
        $region38: #{tpu_custom_call.1} parent=35 // pred_check_branch
          %472 = sbr.rel (%p470) target = $region40
        $region39: #{tpu_custom_call.1} parent=35 // pred_region
          %s473 = smul.u32 7, %s15
          %s474 = ssub.s32 25, %s473
          %p475 = scmp.lt.s32.totalorder %s474, 7
          %s476 = scalar_select %p475, %s474, 7
          %s477 = smul.u32 128, %s476
          %p478 = scmp.ne.s32.totalorder 0, %s477
          %s479 = smul.addr %s473, 8
          %s480 = scalar_lea.vmem %s4, %s479
          // Predicated region
          $region41: #{tpu_custom_call.1} parent=39 // pred_check
            %p481 = pneg %p478
          $region42: #{tpu_custom_call.1} parent=39 // pred_check_branch
            %483 = sbr.rel (%p481) target = $region44
          $region43: #{tpu_custom_call.1} parent=39 // pred_region
            // Predicated region
            $region45: #{tpu_custom_call.1} parent=43 // pred_check
              _
            $region46: #{tpu_custom_call.1} parent=43 // pred_check_branch
              %485 = sbr.rel (0) target = $region48
            $region47: #{tpu_custom_call.1} parent=43 // pred_region
              // Predicated region
              $region67: #{tpu_custom_call.1} parent=47 // pred_check
                _
              $region68: #{tpu_custom_call.1} parent=47 // pred_check_branch
                %547 = sbr.rel (0) target = $region70
              $region69: #{tpu_custom_call.1} parent=47 // pred_region
                %s548 = sdiv.u32.pop %s476, 7
                %s549 = srem.u32.pop %s476, 7
                // While loop
                $region71: #{tpu_custom_call.1} parent=69 // loop_pre_header
                  _
                $region72: #{tpu_custom_call.1} parent=69 // loop_header
                  %s551 = sphi 0, %s553
                  %p552 = scmp.ge.s32.totalorder %s551, %s548
                  %s556 = sphi 0, %s575
                  %s557 = sphi %s469, %s578
                  %s558 = sphi %s480, %s579
                $region73: #{tpu_custom_call.1} parent=69 // loop_header_branch
                  %555 = sbr.rel (%p552) target = $region77
                $region74: #{tpu_custom_call.1} parent=69 // loop_body
                  %v559 = vld [vmem:[%s557] sm:$0xff]
                  %560 = vst [vmem:[%s558] sm:$0xff] %v559
                  %v561 = vld [vmem:[%s557 + $0x8] sm:$0xff]
                  %562 = vst [vmem:[%s558 + $0x8] sm:$0xff] %v561
                  %v563 = vld [vmem:[%s557 + $0x10] sm:$0xff]
                  %564 = vst [vmem:[%s558 + $0x10] sm:$0xff] %v563
                  %v565 = vld [vmem:[%s557 + $0x18] sm:$0xff]
                  %566 = vst [vmem:[%s558 + $0x18] sm:$0xff] %v565
                  %v567 = vld [vmem:[%s557 + $0x20] sm:$0xff]
                  %568 = vst [vmem:[%s558 + $0x20] sm:$0xff] %v567
                  %v569 = vld [vmem:[%s557 + $0x28] sm:$0xff]
                  %570 = vst [vmem:[%s558 + $0x28] sm:$0xff] %v569
                  %v571 = vld [vmem:[%s557 + $0x30] sm:$0xff]
                  %572 = vst [vmem:[%s558 + $0x30] sm:$0xff] %v571
                  %s573 = sadd.s32 1, %s556
                  %p574 = scmp.ge.s32.totalorder %s573, %s548
                  %s575 = scalar_select %p574, 0, %s573
                  %s576 = smul.u32 %s575, 56
                  %s577 = smul.u32 %s575, 56
                  %s578 = scalar_lea.vmem %s469, %s576 [#allocation2]
                  %s579 = scalar_lea.vmem %s480, %s577
                $region75: #{tpu_custom_call.1} parent=69 // loop_footer
                  %s553 = sadd.s32 %s551, 1
                $region76: #{tpu_custom_call.1} parent=69 // loop_footer_branch
                  %550 = sbr.rel target = $region72
                $region77: #{tpu_custom_call.1} parent=69 // loop_exit
                  _
                %s580 = sdiv.u32.pop %s476, 7
                %s581 = srem.u32.pop %s476, 7
                %s582 = smul.u32 %s580, 7
                %s583 = smul.u32 8, %s582
                %s584 = scalar_lea.vmem %s469, %s583 [#allocation2]
                %s585 = smul.u32 8, %s582
                %s586 = scalar_lea.vmem %s480, %s585
                // While loop
                $region78: #{tpu_custom_call.1} parent=69 // loop_pre_header
                  _
                $region79: #{tpu_custom_call.1} parent=69 // loop_header
                  %s588 = sphi 0, %s590
                  %p589 = scmp.ge.s32.totalorder %s588, %s581
                  %s593 = sphi 0, %s600
                  %s594 = sphi %s584, %s603
                  %s595 = sphi %s586, %s604
                $region80: #{tpu_custom_call.1} parent=69 // loop_header_branch
                  %592 = sbr.rel (%p589) target = $region84
                $region81: #{tpu_custom_call.1} parent=69 // loop_body
                  %v596 = vld [vmem:[%s594] sm:$0xff]
                  %597 = vst [vmem:[%s595] sm:$0xff] %v596
                  %s598 = sadd.s32 1, %s593
                  %p599 = scmp.ge.s32.totalorder %s598, %s581
                  %s600 = scalar_select %p599, 0, %s598
                  %s601 = smul.u32 %s600, 8
                  %s602 = smul.u32 %s600, 8
                  %s603 = scalar_lea.vmem %s584, %s601 [#allocation2]
                  %s604 = scalar_lea.vmem %s586, %s602
                $region82: #{tpu_custom_call.1} parent=69 // loop_footer
                  %s590 = sadd.s32 %s588, 1
                $region83: #{tpu_custom_call.1} parent=69 // loop_footer_branch
                  %587 = sbr.rel target = $region79
                $region84: #{tpu_custom_call.1} parent=69 // loop_exit
                  _
              $region70: #{tpu_custom_call.1} parent=47 // pred_fallthru
                _
              // Predicated region
              $region85: #{tpu_custom_call.1} parent=47 // pred_check
                _
              $region86: #{tpu_custom_call.1} parent=47 // pred_check_branch
                %606 = sbr.rel target = $region88
              $region87: #{tpu_custom_call.1} parent=47 // pred_region
                _
              $region88: #{tpu_custom_call.1} parent=47 // pred_fallthru
                _
            $region48: #{tpu_custom_call.1} parent=43 // pred_fallthru
              _
            // Predicated region
            $region49: #{tpu_custom_call.1} parent=43 // pred_check
              _
            $region50: #{tpu_custom_call.1} parent=43 // pred_check_branch
              %487 = sbr.rel target = $region52
            $region51: #{tpu_custom_call.1} parent=43 // pred_region
              %s489 = sdiv.u32.pop %s476, 7
              %s490 = srem.u32.pop %s476, 7
              // While loop
              $region53: #{tpu_custom_call.1} parent=51 // loop_pre_header
                _
              $region54: #{tpu_custom_call.1} parent=51 // loop_header
                %s492 = sphi 0, %s494
                %p493 = scmp.ge.s32.totalorder %s492, %s489
                %s497 = sphi 0, %s516
                %s498 = sphi %s469, %s519
                %s499 = sphi %s480, %s520
              $region55: #{tpu_custom_call.1} parent=51 // loop_header_branch
                %496 = sbr.rel (%p493) target = $region59
              $region56: #{tpu_custom_call.1} parent=51 // loop_body
                %v500 = vld [vmem:[%s498] sm:$0xff]
                %501 = vst [vmem:[%s499] sm:$0xff] %v500
                %v502 = vld [vmem:[%s498 + $0x8] sm:$0xff]
                %503 = vst [vmem:[%s499 + $0x8] sm:$0xff] %v502
                %v504 = vld [vmem:[%s498 + $0x10] sm:$0xff]
                %505 = vst [vmem:[%s499 + $0x10] sm:$0xff] %v504
                %v506 = vld [vmem:[%s498 + $0x18] sm:$0xff]
                %507 = vst [vmem:[%s499 + $0x18] sm:$0xff] %v506
                %v508 = vld [vmem:[%s498 + $0x20] sm:$0xff]
                %509 = vst [vmem:[%s499 + $0x20] sm:$0xff] %v508
                %v510 = vld [vmem:[%s498 + $0x28] sm:$0xff]
                %511 = vst [vmem:[%s499 + $0x28] sm:$0xff] %v510
                %v512 = vld [vmem:[%s498 + $0x30] sm:$0xff]
                %513 = vst [vmem:[%s499 + $0x30] sm:$0xff] %v512
                %s514 = sadd.s32 1, %s497
                %p515 = scmp.ge.s32.totalorder %s514, %s489
                %s516 = scalar_select %p515, 0, %s514
                %s517 = smul.u32 %s516, 56
                %s518 = smul.u32 %s516, 56
                %s519 = scalar_lea.vmem %s469, %s517 [#allocation2]
                %s520 = scalar_lea.vmem %s480, %s518
              $region57: #{tpu_custom_call.1} parent=51 // loop_footer
                %s494 = sadd.s32 %s492, 1
              $region58: #{tpu_custom_call.1} parent=51 // loop_footer_branch
                %491 = sbr.rel target = $region54
              $region59: #{tpu_custom_call.1} parent=51 // loop_exit
                _
              %s521 = sdiv.u32.pop %s476, 7
              %s522 = srem.u32.pop %s476, 7
              %s523 = smul.u32 %s521, 7
              %s524 = smul.u32 8, %s523
              %s525 = scalar_lea.vmem %s469, %s524 [#allocation2]
              %s526 = smul.u32 8, %s523
              %s527 = scalar_lea.vmem %s480, %s526
              // While loop
              $region60: #{tpu_custom_call.1} parent=51 // loop_pre_header
                _
              $region61: #{tpu_custom_call.1} parent=51 // loop_header
                %s529 = sphi 0, %s531
                %p530 = scmp.ge.s32.totalorder %s529, %s522
                %s534 = sphi 0, %s541
                %s535 = sphi %s525, %s544
                %s536 = sphi %s527, %s545
              $region62: #{tpu_custom_call.1} parent=51 // loop_header_branch
                %533 = sbr.rel (%p530) target = $region66
              $region63: #{tpu_custom_call.1} parent=51 // loop_body
                %v537 = vld [vmem:[%s535] sm:$0xff]
                %538 = vst [vmem:[%s536] sm:$0xff] %v537
                %s539 = sadd.s32 1, %s534
                %p540 = scmp.ge.s32.totalorder %s539, %s522
                %s541 = scalar_select %p540, 0, %s539
                %s542 = smul.u32 %s541, 8
                %s543 = smul.u32 %s541, 8
                %s544 = scalar_lea.vmem %s525, %s542 [#allocation2]
                %s545 = scalar_lea.vmem %s527, %s543
              $region64: #{tpu_custom_call.1} parent=51 // loop_footer
                %s531 = sadd.s32 %s529, 1
              $region65: #{tpu_custom_call.1} parent=51 // loop_footer_branch
                %528 = sbr.rel target = $region61
              $region66: #{tpu_custom_call.1} parent=51 // loop_exit
                _
            $region52: #{tpu_custom_call.1} parent=43 // pred_fallthru
              _
          $region44: #{tpu_custom_call.1} parent=39 // pred_fallthru
            _
          %607 = vnop
        $region40: #{tpu_custom_call.1} parent=35 // pred_fallthru
          _
      $region36: #{tpu_custom_call.1} parent=5 // pred_fallthru
        _
      %p608 = scmp.le.s32.totalorder 2, %s10
      // Predicated region
      $region89: #{tpu_custom_call.1} parent=5 // pred_check
        %p609 = pneg %p608
      $region90: #{tpu_custom_call.1} parent=5 // pred_check_branch
        %611 = sbr.rel (%p609) target = $region92
      $region91: #{tpu_custom_call.1} parent=5 // pred_region
        %s612 = ssub.s32 %s10, 2
        // Predicated region
        $region93: #{tpu_custom_call.1} parent=91 // pred_check
          %p613 = pneg %p138
        $region94: #{tpu_custom_call.1} parent=91 // pred_check_branch
          %615 = sbr.rel (%p613) target = $region96
        $region95: #{tpu_custom_call.1} parent=91 // pred_region
          %s616 = sand.u32 %s123, 1
          %s617 = sand.u32 %s123, 1
          %s618 = smul.addr %s617, 56
          %s619 = scalar_lea.vmem [#allocation2], %s618
        $region96: #{tpu_custom_call.1} parent=91 // pred_fallthru
          _
      $region92: #{tpu_custom_call.1} parent=5 // pred_fallthru
        _
    $region6: #{tpu_custom_call.1} parent=1 // loop_footer
      %s14 = sadd.s32 1, %s10
    $region7: #{tpu_custom_call.1} parent=1 // loop_footer_branch
      %9 = sbr.rel target = $region3
    $region8: #{tpu_custom_call.1} parent=1 // loop_exit
      _

</llo_original>
